<compile_context>
chip_gen: v7x
topology: tpu7x:2x2x1
jax: 0.10.0
libtpu: 0.0.40
codegen_flags: <defaults>
</compile_context>

<pallas_src>
import functools

import jax
import jax.numpy as jnp
from jax import lax
from jax.experimental import pallas as pl
from jax.experimental.pallas import tpu as pltpu


def _attention_kernel(s_ref, join_ref, wa_s_ref, wa_j_ref, wv_ref, out_ref, *,
                      lane_dense_out):
    TB, H = s_ref.shape          # batch tile, hidden
    S = join_ref.shape[0]        # src_len

    mm_dtype = wa_s_ref.dtype    # f32 by default; bf16 if requested (v6e/v7x MXU native)
    s_blk = s_ref[...].astype(mm_dtype)         # (TB, H)
    join_blk = join_ref[...].astype(mm_dtype)   # (S, TB, H) -- seq-major, as stored in HBM

    # Linear(2H -> H, bias=False) on cat((s, join), dim=2), decomposed:
    #   cat(s, join) @ W^T == s @ W[:, :H]^T + join @ W[:, H:]^T    (MXU, f32 accumulate)
    e_s = jnp.dot(s_blk, wa_s_ref[...], preferred_element_type=jnp.float32)   # (TB, H)
    # Contract the last axis of the 3-D block directly (no flatten/unflatten reshape).
    e_j = lax.dot_general(join_blk, wa_j_ref[...],
                          dimension_numbers=(((2,), (0,)), ((), ())),
                          preferred_element_type=jnp.float32)                 # (S, TB, H)

    # Elementwise add + tanh; e_s broadcasts only along the leading (seq) axis, so no
    # sublane/lane relayout is materialized. (tanh kept in f32; bf16 tanh is a further
    # v6e/v7x option if the EUP is the binding slot.)
    energy = jnp.tanh(e_j + e_s[None, :, :])                                  # (S, TB, H)

    # Linear(H -> 1, bias=False): VPU multiply + reduce with the (1, H) w_v row.
    scores = jnp.sum(energy * wv_ref[...], axis=-1)                           # (S, TB)

    # Softmax over src_len. Exact normalization (divide) -- rows must sum to 1.
    if lane_dense_out:
        # Batch stays on the lane axis; reduce over sublanes (XLU). Output block is (S, TB).
        m = jnp.max(scores, axis=0, keepdims=True)                            # (1, TB)
        e = jnp.exp(scores - m)
        out_ref[...] = e / jnp.sum(e, axis=0, keepdims=True)                  # (S, TB)
    else:
        # Fallback layout: tiny (S, TB) transpose, softmax over the lane axis.
        sc = jnp.transpose(scores)                                            # (TB, S)
        m = jnp.max(sc, axis=-1, keepdims=True)
        e = jnp.exp(sc - m)
        out_ref[...] = e / jnp.sum(e, axis=-1, keepdims=True)                 # (TB, S)


def _vmem_usage_bytes(tb, s_len, h):
    f32 = 4
    join_tiles = 2 * s_len * tb * h * f32        # double-buffered join input tile
    s_tiles = 2 * tb * h * f32                   # double-buffered s input tile
    weights = 2 * 2 * h * h * f32 + 2 * h * f32  # resident W halves (+buffer slack) + w_v
    out_tiles = 2 * s_len * tb * f32             # double-buffered output tile
    temps = 2 * s_len * tb * h * f32             # e_j / energy f32 intermediates
    return join_tiles + s_tiles + weights + out_tiles + temps


def _pick_batch_tile(b_pad, s_len, h, vmem_budget_bytes):
    candidates = [tb for tb in range(8, b_pad + 1, 8) if b_pad % tb == 0]
    if not candidates:
        return b_pad
    fitting = [tb for tb in candidates
               if _vmem_usage_bytes(tb, s_len, h) <= vmem_budget_bytes]
    if not fitting:
        return candidates[0]
    # Prefer >=2 grid steps (keeps both v7x TensorCores busy) when a fitting tile allows it;
    # on v5e/v6e (1 TC) the cost of one extra step is negligible.
    multi = [tb for tb in fitting if b_pad // tb >= 2]
    pool = multi if multi else fitting
    return max(pool)


def attention_forward(s, join, w_attn, w_v, *, batch_tile=None,
                      matmul_dtype=jnp.float32,
                      vmem_budget_bytes=44 * 1024 * 1024):
    """s: (B, H) f32, join: (S, B, H) f32,
    w_attn: (H, 2H) torch-Linear weight, w_v: (1, H) torch-Linear weight."""
    S, B, H = join.shape
    assert s.shape == (B, H)
    assert w_attn.shape == (H, 2 * H)
    assert w_v.shape == (1, H)

    # Pad batch to a sublane multiple (8); padded rows are sliced off at the end.
    B_pad = ((B + 7) // 8) * 8
    if B_pad != B:
        s = jnp.pad(s, ((0, B_pad - B), (0, 0)))
        join = jnp.pad(join, ((0, 0), (0, B_pad - B), (0, 0)))

    TB = batch_tile if batch_tile is not None else _pick_batch_tile(
        B_pad, S, H, vmem_budget_bytes)
    assert B_pad % TB == 0, "padded batch must be divisible by the batch tile"

    # Tiny weight prep only (H x 2H): split W_attn into its halves and pre-transpose so the
    # kernel issues plain  x @ W  matmuls. No activation-sized wrapper reshapes/transposes.
    wa_s = jnp.transpose(w_attn[:, :H]).astype(matmul_dtype)   # (H, H):  s    @ wa_s
    wa_j = jnp.transpose(w_attn[:, H:]).astype(matmul_dtype)   # (H, H):  join @ wa_j
    wv_row = w_v.astype(jnp.float32)                           # (1, H), VPU broadcast row

    # Lane-dense output layout (batch on lanes) only when the block's last dim is legal
    # under the (8,128) rule; otherwise fall back to (TB, S) blocks.
    lane_dense = (TB % 128 == 0) or (TB == B_pad)

    usage = _vmem_usage_bytes(TB, S, H)
    vmem_limit = int(min(max(2 * usage, 16 * 1024 * 1024), 64 * 1024 * 1024))

    cost = pl.CostEstimate(
        flops=2 * S * B_pad * H * H + 2 * B_pad * H * H + 2 * S * B_pad * H,
        transcendentals=S * B_pad * (H + 1),
        bytes_accessed=4 * (S * B_pad * H + B_pad * H + 2 * H * H + H + S * B_pad),
    )

    kernel = functools.partial(_attention_kernel, lane_dense_out=lane_dense)
    grid = (B_pad // TB,)
    in_specs = [
        pl.BlockSpec((TB, H), lambda b: (b, 0)),        # s: batch tile
        pl.BlockSpec((S, TB, H), lambda b: (0, b, 0)),  # join: sliced in HBM, no transpose
        pl.BlockSpec((H, H), lambda b: (0, 0)),         # W_attn[:, :H]^T (VMEM-resident)
        pl.BlockSpec((H, H), lambda b: (0, 0)),         # W_attn[:, H:]^T (VMEM-resident)
        pl.BlockSpec((1, H), lambda b: (0, 0)),         # w_v row         (VMEM-resident)
    ]
    if lane_dense:
        out_shape = jax.ShapeDtypeStruct((S, B_pad), jnp.float32)
        out_specs = pl.BlockSpec((S, TB), lambda b: (0, b))
    else:
        out_shape = jax.ShapeDtypeStruct((B_pad, S), jnp.float32)
        out_specs = pl.BlockSpec((TB, S), lambda b: (b, 0))

    out = pl.pallas_call(
        kernel,
        out_shape=out_shape,
        grid=grid,
        in_specs=in_specs,
        out_specs=out_specs,
        compiler_params=pltpu.CompilerParams(
            dimension_semantics=("parallel",),          # batch tiles independent (megacore)
            vmem_limit_bytes=vmem_limit,
        ),
        cost_estimate=cost,
    )(s, join, wa_s, wa_j, wv_row)

    if lane_dense:
        out = jnp.transpose(out)                        # tiny (S, B) -> (B, S) plumbing
    return out[:B]


def attention_reference(s, join, w_attn, w_v):
    """Pure-JAX reference mirroring the PyTorch forward, for a sanity check."""
    S, B, H = join.shape
    s_rep = jnp.repeat(s[:, None, :], S, axis=1)        # (B, S, H)
    join_t = jnp.transpose(join, (1, 0, 2))             # (B, S, H)
    cat = jnp.concatenate([s_rep, join_t], axis=2)      # (B, S, 2H)
    energy = jnp.tanh(cat @ w_attn.T)                   # (B, S, H)
    attention = (energy @ w_v.T)[..., 0]                 # (B, S)
    return jax.nn.softmax(attention, axis=1)


if __name__ == "__main__":
    # Small shapes consistent with the module; B=16 exercises a 2-step batch grid (TB=8).
    B, S, H = 16, 8, 32  # batch, src_len, hidden_dim

    key = jax.random.PRNGKey(0)
    k_s, k_j, k_wa, k_wv = jax.random.split(key, 4)

    s = jax.random.normal(k_s, (B, H), dtype=jnp.float32)
    join = jax.random.normal(k_j, (S, B, H), dtype=jnp.float32)
    # Deterministic "Linear" weights (torch shapes: (out, in)); no bias in module.
    w_attn = 0.1 * jax.random.normal(k_wa, (H, 2 * H), dtype=jnp.float32)
    w_v = 0.1 * jax.random.normal(k_wv, (1, H), dtype=jnp.float32)

    out = jax.block_until_ready(attention_forward(s, join, w_attn, w_v))
    ref = attention_reference(s, join, w_attn, w_v)

    assert out.shape == (B, S)
    assert jnp.allclose(out, ref, atol=1e-4, rtol=1e-4), "mismatch vs reference"
    assert jnp.allclose(jnp.sum(out, axis=1), 1.0, atol=1e-4), "softmax rows must sum to ~1"

    print("KERNEL_OK")
</pallas_src>

<mosaic_0001>
module attributes {stable_mosaic.version = 11 : i64} {
  func.func @_attention_kernel(%arg0: i32, %arg1: memref<8x32xf32, #tpu.memory_space<vmem>>, %arg2: memref<8x8x32xf32, #tpu.memory_space<vmem>>, %arg3: memref<32x32xf32, #tpu.memory_space<vmem>>, %arg4: memref<32x32xf32, #tpu.memory_space<vmem>>, %arg5: memref<1x32xf32, #tpu.memory_space<vmem>>, %arg6: memref<8x8xf32, #tpu.memory_space<vmem>>) attributes {dimension_semantics = [#tpu.dimension_semantics<parallel>], iteration_bounds = array<i64: 2>, scalar_prefetch = 0 : i64, scratch_operands = 0 : i64, tpu.core_type = #tpu.core_type<tc>, window_params = [{transform_indices = @transform_0, window_bounds = array<i64: 8, 32>}, {transform_indices = @transform_1, window_bounds = array<i64: 8, 8, 32>}, {pipeline_mode = #tpu.pipeline_mode<synchronous>, transform_indices = @transform_2, window_bounds = array<i64: 32, 32>}, {pipeline_mode = #tpu.pipeline_mode<synchronous>, transform_indices = @transform_3, window_bounds = array<i64: 32, 32>}, {pipeline_mode = #tpu.pipeline_mode<synchronous>, transform_indices = @transform_4, window_bounds = array<i64: 1, 32>}, {transform_indices = @transform_5, window_bounds = array<i64: 8, 8>}]} {
    %c0 = arith.constant 0 : index
    %c0_0 = arith.constant 0 : index
    %0 = vector.load %arg1[%c0, %c0_0] : memref<8x32xf32, #tpu.memory_space<vmem>>, vector<8x32xf32>
    %c0_1 = arith.constant 0 : index
    %c0_2 = arith.constant 0 : index
    %c0_3 = arith.constant 0 : index
    %1 = vector.load %arg2[%c0_1, %c0_2, %c0_3] : memref<8x8x32xf32, #tpu.memory_space<vmem>>, vector<8x8x32xf32>
    %c0_4 = arith.constant 0 : index
    %c0_5 = arith.constant 0 : index
    %2 = vector.load %arg3[%c0_4, %c0_5] : memref<32x32xf32, #tpu.memory_space<vmem>>, vector<32x32xf32>
    %cst = arith.constant dense<0.000000e+00> : vector<8x32xf32>
    %3 = tpu.matmul %0, %2, %cst {dimension_numbers = #tpu.dot_dimension_numbers<[1], [0], [0], [1], [0, 0, 1, 1], [], []>} : vector<8x32xf32>, vector<32x32xf32>, vector<8x32xf32> -> vector<8x32xf32>
    %c0_6 = arith.constant 0 : index
    %c0_7 = arith.constant 0 : index
    %4 = vector.load %arg4[%c0_6, %c0_7] : memref<32x32xf32, #tpu.memory_space<vmem>>, vector<32x32xf32>
    %cst_8 = arith.constant dense<0.000000e+00> : vector<8x8x32xf32>
    %5 = tpu.matmul %1, %4, %cst_8 {dimension_numbers = #tpu.dot_dimension_numbers<[2], [0], [0, 1], [1], [0, 0, 0, 1, 1, 1], [], []>} : vector<8x8x32xf32>, vector<32x32xf32>, vector<8x8x32xf32> -> vector<8x8x32xf32>
    %6 = vector.shape_cast %3 : vector<8x32xf32> to vector<1x8x32xf32>
    %7 = vector.broadcast %6 : vector<1x8x32xf32> to vector<8x8x32xf32>
    %8 = arith.addf %5, %7 : vector<8x8x32xf32>
    %9 = math.tanh %8 : vector<8x8x32xf32>
    %c0_9 = arith.constant 0 : index
    %c0_10 = arith.constant 0 : index
    %10 = vector.load %arg5[%c0_9, %c0_10] : memref<1x32xf32, #tpu.memory_space<vmem>>, vector<1x32xf32>
    %11 = vector.shape_cast %10 : vector<1x32xf32> to vector<1x1x32xf32>
    %12 = vector.broadcast %11 : vector<1x1x32xf32> to vector<8x8x32xf32>
    %13 = arith.mulf %9, %12 : vector<8x8x32xf32>
    %cst_11 = arith.constant dense<0.000000e+00> : vector<8x8xf32>
    %14 = vector.multi_reduction <add>, %13, %cst_11 [2] : vector<8x8x32xf32> to vector<8x8xf32>
    %15 = tpu.transpose %14, [1, 0] : vector<8x8xf32> -> vector<8x8xf32>
    %cst_12 = arith.constant dense<0xFF800000> : vector<8xf32>
    %16 = vector.multi_reduction <maximumf>, %15, %cst_12 [1] : vector<8x8xf32> to vector<8xf32>
    %17 = vector.shape_cast %16 : vector<8xf32> to vector<8x1xf32>
    %18 = vector.broadcast %17 : vector<8x1xf32> to vector<8x8xf32>
    %19 = arith.subf %15, %18 : vector<8x8xf32>
    %20 = math.exp %19 : vector<8x8xf32>
    %cst_13 = arith.constant dense<0.000000e+00> : vector<8xf32>
    %21 = vector.multi_reduction <add>, %20, %cst_13 [1] : vector<8x8xf32> to vector<8xf32>
    %22 = vector.shape_cast %21 : vector<8xf32> to vector<8x1xf32>
    %23 = vector.broadcast %22 : vector<8x1xf32> to vector<8x8xf32>
    %24 = arith.divf %20, %23 : vector<8x8xf32>
    %c0_14 = arith.constant 0 : index
    %c0_15 = arith.constant 0 : index
    %25 = vector.load %arg6[%c0_14, %c0_15] : memref<8x8xf32, #tpu.memory_space<vmem>>, vector<8x8xf32>
    tpu.vector_store %arg6[%c0_14, %c0_15], %24 {strides = array<i32>} : memref<8x8xf32, #tpu.memory_space<vmem>>, vector<8x8xf32>,
    return
  }
  func.func @transform_0(%arg0: i32) -> (i32, i32) {
    %c0_i32 = arith.constant 0 : i32
    %c0_i32_0 = arith.constant 0 : i32
    return %arg0, %c0_i32 : i32, i32
  }
  func.func @transform_1(%arg0: i32) -> (i32, i32, i32) {
    %c0_i32 = arith.constant 0 : i32
    %c0_i32_0 = arith.constant 0 : i32
    %c0_i32_1 = arith.constant 0 : i32
    return %c0_i32, %arg0, %c0_i32_0 : i32, i32, i32
  }
  func.func @transform_2(%arg0: i32) -> (i32, i32) {
    %c0_i32 = arith.constant 0 : i32
    %c0_i32_0 = arith.constant 0 : i32
    %c0_i32_1 = arith.constant 0 : i32
    return %c0_i32, %c0_i32_0 : i32, i32
  }
  func.func @transform_3(%arg0: i32) -> (i32, i32) {
    %c0_i32 = arith.constant 0 : i32
    %c0_i32_0 = arith.constant 0 : i32
    %c0_i32_1 = arith.constant 0 : i32
    return %c0_i32, %c0_i32_0 : i32, i32
  }
  func.func @transform_4(%arg0: i32) -> (i32, i32) {
    %c0_i32 = arith.constant 0 : i32
    %c0_i32_0 = arith.constant 0 : i32
    %c0_i32_1 = arith.constant 0 : i32
    return %c0_i32, %c0_i32_0 : i32, i32
  }
  func.func @transform_5(%arg0: i32) -> (i32, i32) {
    %c0_i32 = arith.constant 0 : i32
    %c0_i32_0 = arith.constant 0 : i32
    return %arg0, %c0_i32 : i32, i32
  }
}

</mosaic_0001>

<llo_original>
// kernel: tpu_custom_call.1
$region0: #{tpu_custom_call.1}
  #allocation0 [shape = 'u32[]', space=smem, size = 0x4, offset = 0x4, fixed_abs, tag = 'smem constant byte address 0x4 - core index']
  #allocation1 [shape = 'u32[144,128]{1,0:T(1,128)}', space=vmem, size = 0x12000, scoped, tag = 'internal scratch']
  %s0 = inlined_call_operand.hbm [shape: f32[16,32], index: 0, kind: input, shape index: {}]
  %s1 = inlined_call_operand.hbm [shape: f32[8,16,32], index: 1, kind: input, shape index: {}]
  %s2 = inlined_call_operand.hbm [shape: f32[32,32], index: 2, kind: input, shape index: {}]
  %s3 = inlined_call_operand.hbm [shape: f32[32,32], index: 3, kind: input, shape index: {}]
  %s4 = inlined_call_operand.vmem [shape: f32[1,32], index: 4, kind: input, shape index: {}]
  %s5 = inlined_call_operand.vmem [shape: f32[16,8], index: 5, kind: output, shape index: {}]
  %s6 = sld [smem:[#allocation0]]
  $region69: #{tpu_custom_call.1} parent=0
    _
  %s8 = ssub.s32 1, %s6
  %s9 = scalar_select 0, %s8, %s6
  $region1: #{tpu_custom_call.1} parent=0
    #allocation2 [shape = 'u8[8192]{0}', space=vmem, size = 0x2000, scoped, tag = 'input window, operand 0']
    #allocation3 [shape = 's32[2]{0}', space=sflag, size = 0x8, scoped, tag = 'scoped memory for tpu_custom_call.1']
    #allocation4 [shape = 'u8[65536]{0}', space=vmem, size = 0x10000, scoped, tag = 'input window, operand 1']
    #allocation5 [shape = 's32[2]{0}', space=sflag, size = 0x8, scoped, tag = 'scoped memory for tpu_custom_call.1']
    #allocation6 [shape = 'u8[16384]{0}', space=vmem, size = 0x4000, scoped, tag = 'input window, operand 2, single buffered']
    #allocation7 [shape = 'u8[16384]{0}', space=vmem, size = 0x4000, scoped, tag = 'input window, operand 3, single buffered']
    #allocation8 [shape = 's32[1]{0}', space=sflag, size = 0x4, scoped, tag = 'scoped memory for tpu_custom_call.1']
    %10 = vsyncpa [#allocation3], 0
    %s11 = scalar_lea.sflag [#allocation3], 1
    %12 = vsyncpa %s11, 0
    %13 = vsyncpa [#allocation5], 0
    %s14 = scalar_lea.sflag [#allocation5], 1
    %15 = vsyncpa %s14, 0
    %16 = vsyncpa [#allocation8], 0
    loop: start=0, step=1, limit=4
    $region2: #{tpu_custom_call.1} parent=1 // loop_pre_header
      _
    $region3: #{tpu_custom_call.1} parent=1 // loop_header
      %s18 = sphi 0, %s22
      %p19 = scmp.ge.s32.totalorder %s18, 4
      %s28 = sphi 0, %s30
      %s31 = sphi 0, %s28
      %s32 = sphi 0, %s31
      %s48 = sphi 0, %s32
      %s54 = sphi 0, %s56
      %s57 = sphi 0, %s54
      %s58 = sphi 0, %s57
      %s74 = sphi 0, %s58
      %s78 = sphi 0, %s78
      %s80 = sphi 0, %s78
      %s81 = sphi 0, %s80
      %s95 = sphi 0, %s81
      %s99 = sphi 0, %s99
      %s101 = sphi 0, %s99
      %s102 = sphi 0, %s101
      %s116 = sphi 0, %s102
      %s120 = sphi 0, %s120
      %s122 = sphi 0, %s120
      %s123 = sphi 0, %s122
      %s137 = sphi 0, %s123
      %s143 = sphi 0, %s145
      %s146 = sphi 0, %s143
      %s147 = sphi 0, %s146
      %s163 = sphi 0, %s147
    $region4: #{tpu_custom_call.1} parent=1 // loop_header_branch
      %21 = sbr.rel (%p19) target = $region8
    $region5: #{tpu_custom_call.1} parent=1 // loop_body
      %s23 = ssub.s32 %s18, 1
      %s24 = ssub.s32 %s18, 2
      %s25 = sadd.s32 %s18, 1
      %s26 = ssub.s32 %s18, %s25
      %p27 = scmp.eq.s32.totalorder %s26, 0
      %s29 = sadd.s32 %s28, 1
      %s30 = scalar_select %p27, %s28, %s29
      %p33 = pneg %p27
      %p34 = scmp.eq.s32.totalorder %s18, 1
      %p35 = por %p33, %p34
      %p36 = scmp.ne.s32.totalorder %s28, %s31
      %p37 = scmp.eq.s32.totalorder %s18, 0
      %p38 = por %p36, %p37
      %p39 = scmp.ne.s32.totalorder %s28, %s31
      %p40 = scmp.eq.s32.totalorder %s23, 1
      %p41 = por %p39, %p40
      %p42 = scmp.ne.s32.totalorder %s31, %s32
      %p43 = scmp.eq.s32.totalorder %s23, 0
      %p44 = por %p42, %p43
      %p45 = scmp.ne.s32.totalorder %s31, %s32
      %p46 = scmp.eq.s32.totalorder %s24, 1
      %p47 = por %p45, %p46
      %p49 = scmp.ne.s32.totalorder %s32, %s48
      %p50 = scmp.eq.s32.totalorder %s24, 0
      %p51 = por %p49, %p50
      %s52 = ssub.s32 %s18, %s25
      %p53 = scmp.eq.s32.totalorder %s52, 0
      %s55 = sadd.s32 %s54, 1
      %s56 = scalar_select %p53, %s54, %s55
      %p59 = pneg %p53
      %p60 = scmp.eq.s32.totalorder %s18, 1
      %p61 = por %p59, %p60
      %p62 = scmp.ne.s32.totalorder %s54, %s57
      %p63 = scmp.eq.s32.totalorder %s18, 0
      %p64 = por %p62, %p63
      %p65 = scmp.ne.s32.totalorder %s54, %s57
      %p66 = scmp.eq.s32.totalorder %s23, 1
      %p67 = por %p65, %p66
      %p68 = scmp.ne.s32.totalorder %s57, %s58
      %p69 = scmp.eq.s32.totalorder %s23, 0
      %p70 = por %p68, %p69
      %p71 = scmp.ne.s32.totalorder %s57, %s58
      %p72 = scmp.eq.s32.totalorder %s24, 1
      %p73 = por %p71, %p72
      %p75 = scmp.ne.s32.totalorder %s58, %s74
      %p76 = scmp.eq.s32.totalorder %s24, 0
      %p77 = por %p75, %p76
      %s79 = sadd.s32 %s78, 1
      %p82 = scmp.eq.s32.totalorder %s18, 1
      %p83 = scmp.ne.s32.totalorder %s78, %s80
      %p84 = scmp.eq.s32.totalorder %s18, 0
      %p85 = por %p83, %p84
      %p86 = scmp.ne.s32.totalorder %s78, %s80
      %p87 = scmp.eq.s32.totalorder %s23, 1
      %p88 = por %p86, %p87
      %p89 = scmp.ne.s32.totalorder %s80, %s81
      %p90 = scmp.eq.s32.totalorder %s23, 0
      %p91 = por %p89, %p90
      %p92 = scmp.ne.s32.totalorder %s80, %s81
      %p93 = scmp.eq.s32.totalorder %s24, 1
      %p94 = por %p92, %p93
      %p96 = scmp.ne.s32.totalorder %s81, %s95
      %p97 = scmp.eq.s32.totalorder %s24, 0
      %p98 = por %p96, %p97
      %s100 = sadd.s32 %s99, 1
      %p103 = scmp.eq.s32.totalorder %s18, 1
      %p104 = scmp.ne.s32.totalorder %s99, %s101
      %p105 = scmp.eq.s32.totalorder %s18, 0
      %p106 = por %p104, %p105
      %p107 = scmp.ne.s32.totalorder %s99, %s101
      %p108 = scmp.eq.s32.totalorder %s23, 1
      %p109 = por %p107, %p108
      %p110 = scmp.ne.s32.totalorder %s101, %s102
      %p111 = scmp.eq.s32.totalorder %s23, 0
      %p112 = por %p110, %p111
      %p113 = scmp.ne.s32.totalorder %s101, %s102
      %p114 = scmp.eq.s32.totalorder %s24, 1
      %p115 = por %p113, %p114
      %p117 = scmp.ne.s32.totalorder %s102, %s116
      %p118 = scmp.eq.s32.totalorder %s24, 0
      %p119 = por %p117, %p118
      %s121 = sadd.s32 %s120, 1
      %p124 = scmp.eq.s32.totalorder %s18, 1
      %p125 = scmp.ne.s32.totalorder %s120, %s122
      %p126 = scmp.eq.s32.totalorder %s18, 0
      %p127 = por %p125, %p126
      %p128 = scmp.ne.s32.totalorder %s120, %s122
      %p129 = scmp.eq.s32.totalorder %s23, 1
      %p130 = por %p128, %p129
      %p131 = scmp.ne.s32.totalorder %s122, %s123
      %p132 = scmp.eq.s32.totalorder %s23, 0
      %p133 = por %p131, %p132
      %p134 = scmp.ne.s32.totalorder %s122, %s123
      %p135 = scmp.eq.s32.totalorder %s24, 1
      %p136 = por %p134, %p135
      %p138 = scmp.ne.s32.totalorder %s123, %s137
      %p139 = scmp.eq.s32.totalorder %s24, 0
      %p140 = por %p138, %p139
      %s141 = ssub.s32 %s18, %s25
      %p142 = scmp.eq.s32.totalorder %s141, 0
      %s144 = sadd.s32 %s143, 1
      %s145 = scalar_select %p142, %s143, %s144
      %p148 = pneg %p142
      %p149 = scmp.eq.s32.totalorder %s18, 1
      %p150 = por %p148, %p149
      %p151 = scmp.ne.s32.totalorder %s143, %s146
      %p152 = scmp.eq.s32.totalorder %s18, 0
      %p153 = por %p151, %p152
      %p154 = scmp.ne.s32.totalorder %s143, %s146
      %p155 = scmp.eq.s32.totalorder %s23, 1
      %p156 = por %p154, %p155
      %p157 = scmp.ne.s32.totalorder %s146, %s147
      %p158 = scmp.eq.s32.totalorder %s23, 0
      %p159 = por %p157, %p158
      %p160 = scmp.ne.s32.totalorder %s146, %s147
      %p161 = scmp.eq.s32.totalorder %s24, 1
      %p162 = por %p160, %p161
      %p164 = scmp.ne.s32.totalorder %s147, %s163
      %p165 = scmp.eq.s32.totalorder %s24, 0
      %p166 = por %p164, %p165
      %p167 = scmp.le.s32.totalorder 1, %s18
      %p168 = scmp.lt.s32.totalorder %s18, 3
      %p169 = pnand %p167, %p168
      %p170 = pneg %p169
      // Predicated region
      $region9: #{tpu_custom_call.1} parent=5 // pred_check
        _
      $region10: #{tpu_custom_call.1} parent=5 // pred_check_branch
        %172 = sbr.rel (%p169) target = $region12
      $region11: #{tpu_custom_call.1} parent=5 // pred_region
        %s173 = ssub.s32 %s18, 1
        // Predicated region
        $region13: #{tpu_custom_call.1} parent=11 // pred_check
          %p174 = pneg %p91
        $region14: #{tpu_custom_call.1} parent=11 // pred_check_branch
          %176 = sbr.rel (%p174) target = $region16
        $region15: #{tpu_custom_call.1} parent=11 // pred_region
          %s178 = ssub.s32 512, 512
          %179 = vsyncadd [#allocation5], %s178
          %s180 = sshll.u32 [#allocation6], 4
          %s181 = int_to_ptr.vmem [resolvable:$true] %s180
          %186 = dma.hbm_to_vmem [thread:$0]  %s2, 512, %s181, [#allocation5], 128, 128, 8
        $region16: #{tpu_custom_call.1} parent=11 // pred_fallthru
          _
        // Predicated region
        $region17: #{tpu_custom_call.1} parent=11 // pred_check
          %p187 = pneg %p112
        $region18: #{tpu_custom_call.1} parent=11 // pred_check_branch
          %189 = sbr.rel (%p187) target = $region20
        $region19: #{tpu_custom_call.1} parent=11 // pred_region
          %s191 = ssub.s32 512, 512
          %192 = vsyncadd [#allocation8], %s191
          %s193 = sshll.u32 [#allocation7], 4
          %s194 = int_to_ptr.vmem [resolvable:$true] %s193
          %199 = dma.hbm_to_vmem [thread:$0]  %s3, 512, %s194, [#allocation8], 128, 128, 8
        $region20: #{tpu_custom_call.1} parent=11 // pred_fallthru
          _
        // Predicated region
        $region21: #{tpu_custom_call.1} parent=11 // pred_check
          %p200 = pneg %p133
        $region22: #{tpu_custom_call.1} parent=11 // pred_check_branch
          %202 = sbr.rel (%p200) target = $region24
        $region23: #{tpu_custom_call.1} parent=11 // pred_region
          _
        $region24: #{tpu_custom_call.1} parent=11 // pred_fallthru
          _
      $region12: #{tpu_custom_call.1} parent=5 // pred_fallthru
        _
      %p203 = scmp.lt.s32.totalorder %s18, 2
      // Predicated region
      $region25: #{tpu_custom_call.1} parent=5 // pred_check
        %p204 = pneg %p203
      $region26: #{tpu_custom_call.1} parent=5 // pred_check_branch
        %206 = sbr.rel (%p204) target = $region28
      $region27: #{tpu_custom_call.1} parent=5 // pred_region
        // Predicated region
        $region29: #{tpu_custom_call.1} parent=27 // pred_check
          %p207 = pneg %p38
        $region30: #{tpu_custom_call.1} parent=27 // pred_check_branch
          %209 = sbr.rel (%p207) target = $region32
        $region31: #{tpu_custom_call.1} parent=27 // pred_region
          %s210 = sand.u32 %s28, 1
          %s211 = scalar_lea.sflag [#allocation3], %s210
          %s212 = sand.u32 %s28, 1
          %s213 = smul.addr %s212, 8
          %s214 = scalar_lea.vmem [#allocation2], %s213
          %s216 = ssub.s32 128, 128
          %217 = vsyncadd %s211, %s216
          %s218 = smul.addr %s18, 128
          %s219 = scalar_lea.hbm %s0, %s218
          %s221 = sshll.u32 %s214, 4
          %s222 = int_to_ptr.vmem [resolvable:$true] %s221
          %224 = dma.hbm_to_vmem [thread:$0]  %s219, 128, %s222, %s211
        $region32: #{tpu_custom_call.1} parent=27 // pred_fallthru
          _
        // Predicated region
        $region33: #{tpu_custom_call.1} parent=27 // pred_check
          %p225 = pneg %p64
        $region34: #{tpu_custom_call.1} parent=27 // pred_check_branch
          %227 = sbr.rel (%p225) target = $region36
        $region35: #{tpu_custom_call.1} parent=27 // pred_region
          %s228 = sand.u32 %s18, 1
          %s229 = scalar_lea.sflag [#allocation5], %s228
          %s230 = sand.u32 %s54, 1
          %s231 = smul.addr %s230, 64
          %s232 = scalar_lea.vmem [#allocation4], %s231
          %s234 = ssub.s32 1024, 1024
          %235 = vsyncadd %s229, %s234
          %s236 = smul.addr %s18, 128
          %s237 = scalar_lea.hbm %s1, %s236
          %s238 = sshll.u32 %s232, 4
          %s239 = int_to_ptr.vmem [resolvable:$true] %s238
          %244 = dma.hbm_to_vmem [thread:$0]  %s237, 1024, %s239, %s229, 256, 128, 8
        $region36: #{tpu_custom_call.1} parent=27 // pred_fallthru
          _
      $region28: #{tpu_custom_call.1} parent=5 // pred_fallthru
        _
      %p245 = scmp.le.s32.totalorder 1, %s18
      %p246 = scmp.lt.s32.totalorder %s18, 3
      %p247 = pnand %p245, %p246
      %p248 = pneg %p247
      // Predicated region
      $region37: #{tpu_custom_call.1} parent=5 // pred_check
        _
      $region38: #{tpu_custom_call.1} parent=5 // pred_check_branch
        %250 = sbr.rel (%p247) target = $region40
      $region39: #{tpu_custom_call.1} parent=5 // pred_region
        %s251 = ssub.s32 %s18, 1
        %s252 = sand.u32 %s31, 1
        %s253 = scalar_lea.sflag [#allocation3], %s252
        %s254 = sand.u32 %s31, 1
        %s255 = smul.addr %s254, 8
        %s256 = scalar_lea.vmem [#allocation2], %s255
        // Predicated region
        $region41: #{tpu_custom_call.1} parent=39 // pred_check
          %p257 = pneg %p44
        $region42: #{tpu_custom_call.1} parent=39 // pred_check_branch
          %259 = sbr.rel (%p257) target = $region44
        $region43: #{tpu_custom_call.1} parent=39 // pred_region
          %260 = dma.done %s253, 128
        $region44: #{tpu_custom_call.1} parent=39 // pred_fallthru
          _
        %s261 = sand.u32 %s23, 1
        %s262 = scalar_lea.sflag [#allocation5], %s261
        %s263 = sand.u32 %s57, 1
        %s264 = smul.addr %s263, 64
        %s265 = scalar_lea.vmem [#allocation4], %s264
        // Predicated region
        $region45: #{tpu_custom_call.1} parent=39 // pred_check
          %p266 = pneg %p70
        $region46: #{tpu_custom_call.1} parent=39 // pred_check_branch
          %268 = sbr.rel (%p266) target = $region48
        $region47: #{tpu_custom_call.1} parent=39 // pred_region
          %269 = dma.done %s262, 1024
        $region48: #{tpu_custom_call.1} parent=39 // pred_fallthru
          _
        // Predicated region
        $region49: #{tpu_custom_call.1} parent=39 // pred_check
          %p270 = pneg %p91
        $region50: #{tpu_custom_call.1} parent=39 // pred_check_branch
          %272 = sbr.rel (%p270) target = $region52
        $region51: #{tpu_custom_call.1} parent=39 // pred_region
          %273 = dma.done [#allocation5], 512
        $region52: #{tpu_custom_call.1} parent=39 // pred_fallthru
          _
        // Predicated region
        $region53: #{tpu_custom_call.1} parent=39 // pred_check
          %p274 = pneg %p112
        $region54: #{tpu_custom_call.1} parent=39 // pred_check_branch
          %276 = sbr.rel (%p274) target = $region56
        $region55: #{tpu_custom_call.1} parent=39 // pred_region
          %277 = dma.done [#allocation8], 512
        $region56: #{tpu_custom_call.1} parent=39 // pred_fallthru
          _
        %s278 = sand.u32 %s31, 1
        %s279 = scalar_lea.sflag [#allocation3], %s278
        %s280 = sand.u32 %s31, 1
        %s281 = smul.addr %s280, 8
        %s282 = scalar_lea.vmem [#allocation2], %s281
        %p283 = pneg %p44
        %p284 = pneg %p41
        %s285 = sand.u32 %s23, 1
        %s286 = scalar_lea.sflag [#allocation5], %s285
        %s287 = sand.u32 %s57, 1
        %s288 = smul.addr %s287, 64
        %s289 = scalar_lea.vmem [#allocation4], %s288
        %p290 = pneg %p70
        %p291 = pneg %p67
        %p292 = pneg %p91
        %p293 = pneg %p88
        %p294 = pneg %p112
        %p295 = pneg %p109
        %p296 = pneg %p133
        %p297 = pneg %p130
        %p298 = pneg %p159
        %p299 = pneg %p156
        %p300 = scmp.lt.s32.totalorder %s23, 1
        %s301 = scalar_select %p300, %s23, 1
        %s302 = smul.addr %s301, 8
        %s303 = scalar_lea.vmem %s5, %s302
        %p304 = scmp.lt.s32.totalorder %s23, 1
        %s305 = scalar_select %p304, %s23, 1
        %s306 = smul.addr %s305, 8
        %s307 = scalar_lea.vmem %s5, %s306
        %v308 = vld [vmem:[%s256] sm:$0xff]
        %v309 = vld [vmem:[%s265] sm:$0xff]
        %v310 = vld [vmem:[%s265 + $0x8] sm:$0xff]
        %v311 = vld [vmem:[%s265 + $0x10] sm:$0xff]
        %v312 = vld [vmem:[%s265 + $0x18] sm:$0xff]
        %v313 = vld [vmem:[%s265 + $0x20] sm:$0xff]
        %v314 = vld [vmem:[%s265 + $0x28] sm:$0xff]
        %v315 = vld [vmem:[%s265 + $0x30] sm:$0xff]
        %v316 = vld [vmem:[%s265 + $0x38] sm:$0xff]
        %v317 = vld [vmem:[#allocation6] sm:$0xff]
        %v318 = vld [vmem:[#allocation6 + $0x8] sm:$0xff]
        %v319 = vld [vmem:[#allocation6 + $0x10] sm:$0xff]
        %v320 = vld [vmem:[#allocation6 + $0x18] sm:$0xff]
        %vm321 = vcmask 261120
        %v323 = vsel %vm321, %v308, 0
        %325 = vmatprep.subr.mxu0 0.0
        %326 = vmatpush1.msra.mxu0 %v317
        %327 = vmatprep.subr.mxu0 0.0
        %328 = vmatpush1.msra.mxu0 %v318
        %329 = vmatprep.subr.mxu0 0.0
        %330 = vmatpush1.msra.mxu0 %v319
        %331 = vmatprep.subr.mxu0 0.0
        %332 = vmatpush1.msra.mxu0 %v320
        %333 = vmatprep.subr.mxu0 0.0
        %334 = vmatpush1.msra.mxu0 0.0
        %335 = vmatprep.subr.mxu0 0.0
        %336 = vmatpush1.msra.mxu0 0.0
        %337 = vmatprep.subr.mxu0 0.0
        %338 = vmatpush1.msra.mxu0 0.0
        %339 = vmatprep.subr.mxu0 0.0
        %340 = vmatpush1.msra.mxu0 0.0
        %341 = vmatprep.subr.mxu0 0.0
        %342 = vmatpush1.msra.mxu0 0.0
        %343 = vmatprep.subr.mxu0 0.0
        %344 = vmatpush1.msra.mxu0 0.0
        %345 = vmatprep.subr.mxu0 0.0
        %346 = vmatpush1.msra.mxu0 0.0
        %347 = vmatprep.subr.mxu0 0.0
        %348 = vmatpush1.msra.mxu0 0.0
        %349 = vmatprep.subr.mxu0 0.0
        %350 = vmatpush1.msra.mxu0 0.0
        %351 = vmatprep.subr.mxu0 0.0
        %352 = vmatpush1.msra.mxu0 0.0
        %353 = vmatprep.subr.mxu0 0.0
        %354 = vmatpush1.msra.mxu0 0.0
        %355 = vmatprep.subr.mxu0 0.0
        %356 = vmatpush1.msra.mxu0 0.0
        %357 = vmatprep.subr.mxu0 0.0
        %358 = vmatpush1.msra.mxu0 0.0
        %359 = vmatprep.subr.mxu0 0.0
        %360 = vmatpush1.msra.mxu0 0.0
        %361 = vmatprep.subr.mxu0 0.0
        %362 = vmatpush1.msra.mxu0 0.0
        %363 = vmatprep.subr.mxu0 0.0
        %364 = vmatpush1.msra.mxu0 0.0
        %365 = vmatprep.subr.mxu0 0.0
        %366 = vmatpush1.msra.mxu0 0.0
        %367 = vmatprep.subr.mxu0 0.0
        %368 = vmatpush1.msra.mxu0 0.0
        %369 = vmatprep.subr.mxu0 0.0
        %370 = vmatpush1.msra.mxu0 0.0
        %371 = vmatprep.subr.mxu0 0.0
        %372 = vmatpush1.msra.mxu0 0.0
        %373 = vmatprep.subr.mxu0 0.0
        %374 = vmatpush1.msra.mxu0 0.0
        %375 = vmatprep.subr.mxu0 0.0
        %376 = vmatpush1.msra.mxu0 0.0
        %377 = vmatprep.subr.mxu0 0.0
        %378 = vmatpush1.msra.mxu0 0.0
        %379 = vmatprep.subr.mxu0 0.0
        %380 = vmatpush1.msra.mxu0 0.0
        %381 = vmatprep.subr.mxu0 0.0
        %382 = vmatpush1.msra.mxu0 0.0
        %383 = vmatprep.subr.mxu0 0.0
        %384 = vmatpush1.msra.mxu0 0.0
        %385 = vmatprep.subr.mxu0 0.0
        %386 = vmatpush1.msra.mxu0 0.0
        %387 = vmatprep.subr.mxu0 0.0
        %388 = vmatpush1.msra.mxu0 0.0
        %389 = vmatprep.mubr.f32.mxu0 0.0
        %390 = vmatmul.mubr.f32.gmra.mrb[0].mxu0 %v323
        %v391 = vpop.f32.mrb[0].mxu0
        %v392 = vadd.f32 0.0, %v391
        %v393 = vpop.f32.mrb[0].mxu0
        %394 = vdwg.mxu0
        %v395 = vld [vmem:[#allocation7] sm:$0xff]
        %v396 = vld [vmem:[#allocation7 + $0x8] sm:$0xff]
        %v397 = vld [vmem:[#allocation7 + $0x10] sm:$0xff]
        %v398 = vld [vmem:[#allocation7 + $0x18] sm:$0xff]
        %v400 = vsel %vm321, %v309, 0
        %v403 = vsel %vm321, %v310, 0
        %v406 = vsel %vm321, %v311, 0
        %v409 = vsel %vm321, %v312, 0
        %v412 = vsel %vm321, %v313, 0
        %v415 = vsel %vm321, %v314, 0
        %v418 = vsel %vm321, %v315, 0
        %v421 = vsel %vm321, %v316, 0
        %423 = vmatprep.subr.mxu0 0.0
        %424 = vmatpush1.msra.mxu0 %v395
        %425 = vmatprep.subr.mxu0 0.0
        %426 = vmatpush1.msra.mxu0 %v396
        %427 = vmatprep.subr.mxu0 0.0
        %428 = vmatpush1.msra.mxu0 %v397
        %429 = vmatprep.subr.mxu0 0.0
        %430 = vmatpush1.msra.mxu0 %v398
        %431 = vmatprep.subr.mxu0 0.0
        %432 = vmatpush1.msra.mxu0 0.0
        %433 = vmatprep.subr.mxu0 0.0
        %434 = vmatpush1.msra.mxu0 0.0
        %435 = vmatprep.subr.mxu0 0.0
        %436 = vmatpush1.msra.mxu0 0.0
        %437 = vmatprep.subr.mxu0 0.0
        %438 = vmatpush1.msra.mxu0 0.0
        %439 = vmatprep.subr.mxu0 0.0
        %440 = vmatpush1.msra.mxu0 0.0
        %441 = vmatprep.subr.mxu0 0.0
        %442 = vmatpush1.msra.mxu0 0.0
        %443 = vmatprep.subr.mxu0 0.0
        %444 = vmatpush1.msra.mxu0 0.0
        %445 = vmatprep.subr.mxu0 0.0
        %446 = vmatpush1.msra.mxu0 0.0
        %447 = vmatprep.subr.mxu0 0.0
        %448 = vmatpush1.msra.mxu0 0.0
        %449 = vmatprep.subr.mxu0 0.0
        %450 = vmatpush1.msra.mxu0 0.0
        %451 = vmatprep.subr.mxu0 0.0
        %452 = vmatpush1.msra.mxu0 0.0
        %453 = vmatprep.subr.mxu0 0.0
        %454 = vmatpush1.msra.mxu0 0.0
        %455 = vmatprep.subr.mxu0 0.0
        %456 = vmatpush1.msra.mxu0 0.0
        %457 = vmatprep.subr.mxu0 0.0
        %458 = vmatpush1.msra.mxu0 0.0
        %459 = vmatprep.subr.mxu0 0.0
        %460 = vmatpush1.msra.mxu0 0.0
        %461 = vmatprep.subr.mxu0 0.0
        %462 = vmatpush1.msra.mxu0 0.0
        %463 = vmatprep.subr.mxu0 0.0
        %464 = vmatpush1.msra.mxu0 0.0
        %465 = vmatprep.subr.mxu0 0.0
        %466 = vmatpush1.msra.mxu0 0.0
        %467 = vmatprep.subr.mxu0 0.0
        %468 = vmatpush1.msra.mxu0 0.0
        %469 = vmatprep.subr.mxu0 0.0
        %470 = vmatpush1.msra.mxu0 0.0
        %471 = vmatprep.subr.mxu0 0.0
        %472 = vmatpush1.msra.mxu0 0.0
        %473 = vmatprep.subr.mxu0 0.0
        %474 = vmatpush1.msra.mxu0 0.0
        %475 = vmatprep.subr.mxu0 0.0
        %476 = vmatpush1.msra.mxu0 0.0
        %477 = vmatprep.subr.mxu0 0.0
        %478 = vmatpush1.msra.mxu0 0.0
        %479 = vmatprep.subr.mxu0 0.0
        %480 = vmatpush1.msra.mxu0 0.0
        %481 = vmatprep.subr.mxu0 0.0
        %482 = vmatpush1.msra.mxu0 0.0
        %483 = vmatprep.subr.mxu0 0.0
        %484 = vmatpush1.msra.mxu0 0.0
        %485 = vmatprep.subr.mxu0 0.0
        %486 = vmatpush1.msra.mxu0 0.0
        %487 = vmatprep.mubr.f32.mxu0 0.0
        %488 = vmatmul.mubr.f32.gmra.mrb[0].mxu0 %v400
        %v489 = vpop.f32.mrb[0].mxu0
        %v490 = vadd.f32 %v392, %v489
        %v491 = vpop.f32.mrb[0].mxu0
        %492 = vmatprep.mubr.f32.mxu0 0.0
        %493 = vmatmul.mubr.f32.gmra.mrb[0].mxu0 %v403
        %v494 = vpop.f32.mrb[0].mxu0
        %v495 = vadd.f32 %v392, %v494
        %v496 = vpop.f32.mrb[0].mxu0
        %497 = vmatprep.mubr.f32.mxu0 0.0
        %498 = vmatmul.mubr.f32.gmra.mrb[0].mxu0 %v406
        %v499 = vpop.f32.mrb[0].mxu0
        %v500 = vadd.f32 %v392, %v499
        %v501 = vpop.f32.mrb[0].mxu0
        %502 = vmatprep.mubr.f32.mxu0 0.0
        %503 = vmatmul.mubr.f32.gmra.mrb[0].mxu0 %v409
        %v504 = vpop.f32.mrb[0].mxu0
        %v505 = vadd.f32 %v392, %v504
        %v506 = vpop.f32.mrb[0].mxu0
        %507 = vmatprep.mubr.f32.mxu0 0.0
        %508 = vmatmul.mubr.f32.gmra.mrb[0].mxu0 %v412
        %v509 = vpop.f32.mrb[0].mxu0
        %v510 = vadd.f32 %v392, %v509
        %v511 = vpop.f32.mrb[0].mxu0
        %512 = vmatprep.mubr.f32.mxu0 0.0
        %513 = vmatmul.mubr.f32.gmra.mrb[0].mxu0 %v415
        %v514 = vpop.f32.mrb[0].mxu0
        %v515 = vadd.f32 %v392, %v514
        %v516 = vpop.f32.mrb[0].mxu0
        %517 = vmatprep.mubr.f32.mxu0 0.0
        %518 = vmatmul.mubr.f32.gmra.mrb[0].mxu0 %v418
        %v519 = vpop.f32.mrb[0].mxu0
        %v520 = vadd.f32 %v392, %v519
        %v521 = vpop.f32.mrb[0].mxu0
        %522 = vmatprep.mubr.f32.mxu0 0.0
        %523 = vmatmul.mubr.f32.gmra.mrb[0].mxu0 %v421
        %v524 = vpop.f32.mrb[0].mxu0
        %v525 = vadd.f32 %v392, %v524
        %v526 = vpop.f32.mrb[0].mxu0
        %527 = vdwg.mxu0
        %v528 = vtanh.pop %v490
        %v529 = vtanh.pop %v495
        %v530 = vtanh.pop %v500
        %v531 = vtanh.pop %v505
        %v532 = vtanh.pop %v510
        %v533 = vtanh.pop %v515
        %v534 = vtanh.pop %v520
        %v535 = vtanh.pop %v525
        %v536 = vld [vmem:[%s4] sm:$0x1]
        %v538 = vlaneseq
        %v539 = vshrl.u32 %v538, 7
        %v540 = vsub.s32 0, %v539
        %v541 = vrot.slane %v536, %v540
        %v543 = vmul.f32 %v528, %v541
        %v544 = vmul.f32 %v529, %v541
        %v545 = vmul.f32 %v530, %v541
        %v546 = vmul.f32 %v531, %v541
        %v547 = vmul.f32 %v532, %v541
        %v548 = vmul.f32 %v533, %v541
        %v549 = vmul.f32 %v534, %v541
        %v550 = vmul.f32 %v535, %v541
        %v551 = vsel %vm321, %v543, 0.0
        %552 = vadd.xlane.f32.xlu0 %v551
        %v553 = vpop.xlane.xlu0 %552
        %v554 = vsel %vm321, %v544, 0.0
        %555 = vadd.xlane.f32.xlu0 %v554
        %v556 = vpop.xlane.xlu0 %555
        %v557 = vsel %vm321, %v545, 0.0
        %558 = vadd.xlane.f32.xlu0 %v557
        %v559 = vpop.xlane.xlu0 %558
        %v560 = vsel %vm321, %v546, 0.0
        %561 = vadd.xlane.f32.xlu0 %v560
        %v562 = vpop.xlane.xlu0 %561
        %v563 = vsel %vm321, %v547, 0.0
        %564 = vadd.xlane.f32.xlu0 %v563
        %v565 = vpop.xlane.xlu0 %564
        %v566 = vsel %vm321, %v548, 0.0
        %567 = vadd.xlane.f32.xlu0 %v566
        %v568 = vpop.xlane.xlu0 %567
        %v569 = vsel %vm321, %v549, 0.0
        %570 = vadd.xlane.f32.xlu0 %v569
        %v571 = vpop.xlane.xlu0 %570
        %v572 = vsel %vm321, %v550, 0.0
        %573 = vadd.xlane.f32.xlu0 %v572
        %v574 = vpop.xlane.xlu0 %573
        %v583 = vlaneseq
        %v584 = vand.u32 %v583, 127
        %v585 = vlaneseq
        %v586 = vshrl.u32 %v585, 7
        %v587 = vsub.s32 %v584, %v586
        %v588 = vrot.slane %v553, %v587
        %v589 = vlaneseq
        %v590 = vshrl.u32 %v589, 7
        %v591 = vsub.s32 %v584, %v590
        %v592 = vrot.slane %v556, %v591
        %v593 = vlaneseq
        %v594 = vshrl.u32 %v593, 7
        %v595 = vsub.s32 %v584, %v594
        %v596 = vrot.slane %v559, %v595
        %v597 = vlaneseq
        %v598 = vshrl.u32 %v597, 7
        %v599 = vsub.s32 %v584, %v598
        %v600 = vrot.slane %v562, %v599
        %v601 = vlaneseq
        %v602 = vshrl.u32 %v601, 7
        %v603 = vsub.s32 %v584, %v602
        %v604 = vrot.slane %v565, %v603
        %v605 = vlaneseq
        %v606 = vshrl.u32 %v605, 7
        %v607 = vsub.s32 %v584, %v606
        %v608 = vrot.slane %v568, %v607
        %v609 = vlaneseq
        %v610 = vshrl.u32 %v609, 7
        %v611 = vsub.s32 %v584, %v610
        %v612 = vrot.slane %v571, %v611
        %v613 = vlaneseq
        %v614 = vshrl.u32 %v613, 7
        %v615 = vsub.s32 %v584, %v614
        %v616 = vrot.slane %v574, %v615
        %vm617 = vcmask 1041409
        %v618 = vsel %vm617, %v592, %v588
        %vm619 = vcmask 1042434
        %v620 = vsel %vm619, %v596, %v618
        %vm621 = vcmask 1043459
        %v622 = vsel %vm621, %v600, %v620
        %vm623 = vcmask 1044484
        %v624 = vsel %vm623, %v604, %v622
        %vm625 = vcmask 1045509
        %v626 = vsel %vm625, %v608, %v624
        %vm627 = vcmask 1046534
        %v628 = vsel %vm627, %v612, %v626
        %vm629 = vcmask 1047559
        %v630 = vsel %vm629, %v616, %v628
        %632 = vxpose.xlu0.b32.start [1/16] %v630, 128
        %633 = vxpose.xlu0.b32.cont [2/16] 0.0, 128
        %634 = vxpose.xlu0.b32.cont [3/16] 0.0, 128
        %635 = vxpose.xlu0.b32.cont [4/16] 0.0, 128
        %636 = vxpose.xlu0.b32.cont [5/16] 0.0, 128
        %637 = vxpose.xlu0.b32.cont [6/16] 0.0, 128
        %638 = vxpose.xlu0.b32.cont [7/16] 0.0, 128
        %639 = vxpose.xlu0.b32.cont [8/16] 0.0, 128
        %640 = vxpose.xlu0.b32.cont [9/16] 0.0, 128
        %641 = vxpose.xlu0.b32.cont [10/16] 0.0, 128
        %642 = vxpose.xlu0.b32.cont [11/16] 0.0, 128
        %643 = vxpose.xlu0.b32.cont [12/16] 0.0, 128
        %644 = vxpose.xlu0.b32.cont [13/16] 0.0, 128
        %645 = vxpose.xlu0.b32.cont [14/16] 0.0, 128
        %646 = vxpose.xlu0.b32.cont [15/16] 0.0, 128
        %647 = vxpose.xlu0.b32.end [16/16] 0.0, 128
        %v648 = vpop.trf.xlu0
        %v649 = vpop.trf.xlu0
        %v650 = vpop.trf.xlu0
        %v651 = vpop.trf.xlu0
        %v652 = vpop.trf.xlu0
        %v653 = vpop.trf.xlu0
        %v654 = vpop.trf.xlu0
        %v655 = vpop.trf.xlu0
        %v656 = vpop.trf.xlu0
        %v657 = vpop.trf.xlu0
        %v658 = vpop.trf.xlu0
        %v659 = vpop.trf.xlu0
        %v660 = vpop.trf.xlu0
        %v661 = vpop.trf.xlu0
        %v662 = vpop.trf.xlu0
        %v663 = vpop.trf.xlu0
        %vm664 = vcmask 64512
        %v665 = vsel %vm664, %v648, -inf
        %666 = vmax.xlane.f32.xlu0 %v665
        %v667 = vpop.xlane.xlu0 %666
        %v668 = vsub.f32 %v648, %v667
        %v669 = vmul.f32 %v668, 1.442695
        %v670 = vpow.pop %v669
        %v671 = vsel %vm664, %v670, 0.0
        %672 = vadd.xlane.f32.xlu0 %v671
        %v673 = vpop.xlane.xlu0 %672
        %v674 = vrcp.pop %v673
        %v675 = vmul.f32 %v670, %v674
        %676 = vst.msk [vmem:[%s307] sm:$0xff] %vm664, %v675
        %p677 = scmp.lt.s32.totalorder %s23, 1
        %s678 = scalar_select %p677, %s23, 1
        %s679 = smul.addr %s678, 8
        %s680 = scalar_lea.vmem %s5, %s679
        // Predicated region
        $region57: #{tpu_custom_call.1} parent=39 // pred_check
          %p681 = pneg %p156
        $region58: #{tpu_custom_call.1} parent=39 // pred_check_branch
          %683 = sbr.rel (%p681) target = $region60
        $region59: #{tpu_custom_call.1} parent=39 // pred_region
          _
        $region60: #{tpu_custom_call.1} parent=39 // pred_fallthru
          _
      $region40: #{tpu_custom_call.1} parent=5 // pred_fallthru
        _
      %p684 = scmp.le.s32.totalorder 2, %s18
      // Predicated region
      $region61: #{tpu_custom_call.1} parent=5 // pred_check
        %p685 = pneg %p684
      $region62: #{tpu_custom_call.1} parent=5 // pred_check_branch
        %687 = sbr.rel (%p685) target = $region64
      $region63: #{tpu_custom_call.1} parent=5 // pred_region
        %s688 = ssub.s32 %s18, 2
        // Predicated region
        $region65: #{tpu_custom_call.1} parent=63 // pred_check
          %p689 = pneg %p162
        $region66: #{tpu_custom_call.1} parent=63 // pred_check_branch
          %691 = sbr.rel (%p689) target = $region68
        $region67: #{tpu_custom_call.1} parent=63 // pred_region
          %p692 = scmp.lt.s32.totalorder %s24, 1
          %s693 = scalar_select %p692, %s24, 1
          %s694 = smul.addr %s693, 8
          %s695 = scalar_lea.vmem %s5, %s694
        $region68: #{tpu_custom_call.1} parent=63 // pred_fallthru
          _
      $region64: #{tpu_custom_call.1} parent=5 // pred_fallthru
        _
    $region6: #{tpu_custom_call.1} parent=1 // loop_footer
      %s22 = sadd.s32 1, %s18
    $region7: #{tpu_custom_call.1} parent=1 // loop_footer_branch
      %17 = sbr.rel target = $region3
    $region8: #{tpu_custom_call.1} parent=1 // loop_exit
      _
    %696 = vsyncpa [#allocation3], 1
    %s697 = scalar_lea.sflag [#allocation3], 1
    %698 = vsyncpa %s697, 1
    %699 = vsyncpa [#allocation5], 1
    %s700 = scalar_lea.sflag [#allocation5], 1
    %701 = vsyncpa %s700, 1
    %702 = vsyncpa [#allocation8], 1

</llo_original>
